<compile_context>
chip_gen: v7x
topology: tpu7x:2x2x1
jax: 0.10.0
libtpu: 0.0.40
codegen_flags: <defaults>
</compile_context>

<pallas_src>
import functools

import jax
import jax.numpy as jnp
from jax import lax
from jax.experimental import pallas as pl
from jax.experimental.pallas import tpu as pltpu

_LANES = 128
_SUBLANES = 8


def _round_up(x, m):
    return ((x + m - 1) // m) * m


def _fc_kernel(x_ref, w_ref, b_ref, o_ref, *, compute_dtype):
    # x_ref: (tb, D)  input dtype     w_ref: (C, D) compute_dtype (cast in wrapper)
    # b_ref: (1, C)   f32             o_ref: (tb, C) f32   (unpadded, C is full extent)
    x = x_ref[...].astype(compute_dtype)          # no-op when already compute_dtype
    acc = lax.dot_general(                        # contract D axes; W stays (C, D)
        x, w_ref[...],
        dimension_numbers=(((1,), (1,)), ((), ())),
        preferred_element_type=jnp.float32,
    )                                             # (tb, C) f32 accumulator
    o_ref[...] = acc + b_ref[...]                 # bias add + store (lane-masked but tiny)


def _xla_forward(x, weight, bias):
    return (x.astype(jnp.float32) @ weight.astype(jnp.float32).T
            + bias.astype(jnp.float32))


def polar_embedding_classifier_forward(polar_embeddings, weight, bias, *,
                                       block_b=8192, use_pallas=None):
    """logits = dropout_eval(polar_embeddings.float()) @ weight.T + bias.

    polar_embeddings: (B, D)  any float dtype (bf16 kept native on the MXU)
    weight:           (C, D)  as stored by nn.Linear
    bias:             (C,)
    returns logits:   (B, C)  float32
    """
    B, D = polar_embeddings.shape
    C, D_w = weight.shape
    assert D == D_w, "weight in_features must match embedding dim"

    # Small-batch fallback: launching a Pallas kernel only pays off once the
    # HBM stream is multiple microseconds long.
    if use_pallas is None:
        use_pallas = B >= 2048
    if not use_pallas:
        return _xla_forward(polar_embeddings, weight, bias)

    # Native bf16 MXU path when both operands are bf16 (f32 accumulate);
    # otherwise compute in f32, matching the `.float()` reference.
    if polar_embeddings.dtype == jnp.bfloat16 and weight.dtype == jnp.bfloat16:
        compute_dtype = jnp.bfloat16
    else:
        compute_dtype = jnp.float32

    w = weight.astype(compute_dtype)              # cast ONCE, not per grid step
    b = bias.astype(jnp.float32).reshape(1, C)

    # Batch tiling.  block_b is a multiple of 8; for large B it is the tile,
    # for moderate B we still split into >=2 grid steps so the "parallel"
    # batch axis can use both TensorCores on v7x.
    block_b = _round_up(block_b, _SUBLANES)
    if B > block_b:
        tb = block_b
    elif B >= 2 * _SUBLANES:
        tb = _round_up(pl.cdiv(B, 2), _SUBLANES)
    else:
        tb = B
    grid = (pl.cdiv(B, tb),)

    # VMEM estimate (double-buffered, lane-padded layouts): x tile pads its
    # 32-wide last dim to 128 lanes, output pads C to 128 lanes in VMEM.
    tb_pad = _round_up(tb, _SUBLANES)
    x_row = _round_up(D, _LANES) * polar_embeddings.dtype.itemsize
    o_row = _round_up(C, _LANES) * 4
    est = 2 * tb_pad * (x_row + o_row)            # x + out, double-buffered
    est += 2 * (_round_up(C, _SUBLANES) * _round_up(D, _LANES) * w.dtype.itemsize
                + _round_up(C, _LANES) * 4 * _SUBLANES)   # resident weight + bias
    vmem_limit = int(min(max(est + (4 << 20), 32 << 20), 48 << 20))

    return pl.pallas_call(
        functools.partial(_fc_kernel, compute_dtype=compute_dtype),
        out_shape=jax.ShapeDtypeStruct((B, C), jnp.float32),   # unpadded output
        grid_spec=pltpu.PrefetchScalarGridSpec(
            num_scalar_prefetch=0,
            grid=grid,
            in_specs=[
                pl.BlockSpec((tb, D), lambda i: (i, 0)),   # x tile (pipelined)
                pl.BlockSpec((C, D), lambda i: (0, 0)),    # weight (resident)
                pl.BlockSpec((1, C), lambda i: (0, 0)),    # bias   (resident)
            ],
            out_specs=pl.BlockSpec((tb, C), lambda i: (i, 0)),
        ),
        compiler_params=pltpu.CompilerParams(
            dimension_semantics=("parallel",),             # batch axis -> megacore
            vmem_limit_bytes=vmem_limit,
        ),
    )(polar_embeddings, w, b)


if __name__ == "__main__":
    # Small shapes consistent with the module: batch=8, polar_dimension=32,
    # num_classes=4.
    batch = 8
    polar_dimension = 32
    num_classes = 4

    key = jax.random.PRNGKey(0)
    k_x, k_w, k_b, k_x2 = jax.random.split(key, 4)

    # Parameter init mimicking nn.Linear's U(-1/sqrt(in), 1/sqrt(in)).
    bound = 1.0 / (polar_dimension ** 0.5)
    weight = jax.random.uniform(
        k_w, (num_classes, polar_dimension), jnp.float32, -bound, bound)
    bias = jax.random.uniform(
        k_b, (num_classes,), jnp.float32, -bound, bound)

    x = jax.random.normal(k_x, (batch, polar_dimension), jnp.float32)
    ref = x @ weight.T + bias

    # 1) f32 path through the Pallas kernel (forced, single tile).
    logits = polar_embedding_classifier_forward(x, weight, bias, use_pallas=True)
    logits = jax.block_until_ready(logits)
    assert logits.shape == (batch, num_classes)
    assert jnp.allclose(logits, ref, atol=1e-5, rtol=1e-5)

    # 2) multi-tile path with a partial last tile (grid > 1, B not multiple of tb).
    x2 = jax.random.normal(k_x2, (200, polar_dimension), jnp.float32)
    logits2 = polar_embedding_classifier_forward(
        x2, weight, bias, use_pallas=True, block_b=64)
    logits2 = jax.block_until_ready(logits2)
    ref2 = x2 @ weight.T + bias
    assert logits2.shape == (200, num_classes)
    assert jnp.allclose(logits2, ref2, atol=1e-5, rtol=1e-5)

    # 3) bf16 fast path (native MXU bf16, f32 accumulation) — looser tolerance.
    logits3 = polar_embedding_classifier_forward(
        x.astype(jnp.bfloat16), weight.astype(jnp.bfloat16), bias, use_pallas=True)
    logits3 = jax.block_until_ready(logits3)
    assert jnp.allclose(logits3, ref, atol=5e-2, rtol=5e-2)

    print("KERNEL_OK")
</pallas_src>

<mosaic_0001>
module attributes {stable_mosaic.version = 11 : i64} {
  func.func @_fc_kernel(%arg0: i32, %arg1: memref<8x32xf32, #tpu.memory_space<vmem>>, %arg2: memref<4x32xf32, #tpu.memory_space<vmem>>, %arg3: memref<1x4xf32, #tpu.memory_space<vmem>>, %arg4: memref<8x4xf32, #tpu.memory_space<vmem>>) attributes {dimension_semantics = [#tpu.dimension_semantics<parallel>], iteration_bounds = array<i64: 1>, scalar_prefetch = 0 : i64, scratch_operands = 0 : i64, tpu.core_type = #tpu.core_type<tc>, window_params = [{transform_indices = @transform_0, window_bounds = array<i64: 8, 32>}, {pipeline_mode = #tpu.pipeline_mode<synchronous>, transform_indices = @transform_1, window_bounds = array<i64: 4, 32>}, {pipeline_mode = #tpu.pipeline_mode<synchronous>, transform_indices = @transform_2, window_bounds = array<i64: 1, 4>}, {transform_indices = @transform_3, window_bounds = array<i64: 8, 4>}]} {
    %c0 = arith.constant 0 : index
    %c0_0 = arith.constant 0 : index
    %0 = vector.load %arg1[%c0, %c0_0] : memref<8x32xf32, #tpu.memory_space<vmem>>, vector<8x32xf32>
    %c0_1 = arith.constant 0 : index
    %c0_2 = arith.constant 0 : index
    %1 = vector.load %arg2[%c0_1, %c0_2] : memref<4x32xf32, #tpu.memory_space<vmem>>, vector<4x32xf32>
    %cst = arith.constant dense<0.000000e+00> : vector<8x4xf32>
    %2 = tpu.matmul %0, %1, %cst {dimension_numbers = #tpu.dot_dimension_numbers<[1], [1], [0], [0], [0, 0, 1, 0], [], []>} : vector<8x32xf32>, vector<4x32xf32>, vector<8x4xf32> -> vector<8x4xf32>
    %c0_3 = arith.constant 0 : index
    %c0_4 = arith.constant 0 : index
    %3 = vector.load %arg3[%c0_3, %c0_4] : memref<1x4xf32, #tpu.memory_space<vmem>>, vector<1x4xf32>
    %4 = vector.broadcast %3 : vector<1x4xf32> to vector<8x4xf32>
    %5 = arith.addf %2, %4 : vector<8x4xf32>
    %c0_5 = arith.constant 0 : index
    %c0_6 = arith.constant 0 : index
    %6 = vector.load %arg4[%c0_5, %c0_6] : memref<8x4xf32, #tpu.memory_space<vmem>>, vector<8x4xf32>
    tpu.vector_store %arg4[%c0_5, %c0_6], %5 {strides = array<i32>} : memref<8x4xf32, #tpu.memory_space<vmem>>, vector<8x4xf32>,
    return
  }
  func.func @transform_0(%arg0: i32) -> (i32, i32) {
    %c0_i32 = arith.constant 0 : i32
    %c0_i32_0 = arith.constant 0 : i32
    return %arg0, %c0_i32 : i32, i32
  }
  func.func @transform_1(%arg0: i32) -> (i32, i32) {
    %c0_i32 = arith.constant 0 : i32
    %c0_i32_0 = arith.constant 0 : i32
    %c0_i32_1 = arith.constant 0 : i32
    return %c0_i32, %c0_i32_0 : i32, i32
  }
  func.func @transform_2(%arg0: i32) -> (i32, i32) {
    %c0_i32 = arith.constant 0 : i32
    %c0_i32_0 = arith.constant 0 : i32
    %c0_i32_1 = arith.constant 0 : i32
    return %c0_i32, %c0_i32_0 : i32, i32
  }
  func.func @transform_3(%arg0: i32) -> (i32, i32) {
    %c0_i32 = arith.constant 0 : i32
    %c0_i32_0 = arith.constant 0 : i32
    return %arg0, %c0_i32 : i32, i32
  }
}

</mosaic_0001>

<llo_original>
// kernel: tpu_custom_call.1
$region0: #{tpu_custom_call.1}
  #allocation0 [shape = 'u32[]', space=smem, size = 0x4, offset = 0x4, fixed_abs, tag = 'smem constant byte address 0x4 - core index']
  #allocation1 [shape = 'u32[144,128]{1,0:T(1,128)}', space=vmem, size = 0x12000, scoped, tag = 'internal scratch']
  %s0 = inlined_call_operand.hbm [shape: f32[8,32], index: 0, kind: input, shape index: {}]
  %s1 = inlined_call_operand.hbm [shape: f32[4,32], index: 1, kind: input, shape index: {}]
  %s2 = inlined_call_operand.vmem [shape: f32[1,4], index: 2, kind: input, shape index: {}]
  %s3 = inlined_call_operand.vmem [shape: f32[8,4], index: 3, kind: output, shape index: {}]
  %s4 = sld [smem:[#allocation0]]
  $region30: #{tpu_custom_call.1} parent=0
    _
  %s6 = ssub.s32 1, %s4
  %s7 = scalar_select 0, %s6, %s4
  $region1: #{tpu_custom_call.1} parent=0
    #allocation2 [shape = 'u8[4096]{0}', space=vmem, size = 0x1000, scoped, tag = 'input window, operand 0, single buffered']
    #allocation3 [shape = 's32[1]{0}', space=sflag, size = 0x4, scoped, tag = 'scoped memory for tpu_custom_call.1']
    #allocation4 [shape = 'u8[2048]{0}', space=vmem, size = 0x800, scoped, tag = 'input window, operand 1, single buffered']
    #allocation5 [shape = 's32[1]{0}', space=sflag, size = 0x4, scoped, tag = 'scoped memory for tpu_custom_call.1']
    %8 = vsyncpa [#allocation3], 0
    %9 = vsyncpa [#allocation5], 0
    // Predicated region
    $region2: #{tpu_custom_call.1} parent=1 // pred_check
      _
    $region3: #{tpu_custom_call.1} parent=1 // pred_check_branch
      %11 = sbr.rel (0) target = $region5
    $region4: #{tpu_custom_call.1} parent=1 // pred_region
      %s13 = ssub.s32 128, 128
      %14 = vsyncadd [#allocation3], %s13
      %s16 = sshll.u32 [#allocation2], 4
      %s17 = int_to_ptr.vmem [resolvable:$true] %s16
      %19 = dma.hbm_to_vmem [thread:$0]  %s0, 128, %s17, [#allocation3]
    $region5: #{tpu_custom_call.1} parent=1 // pred_fallthru
      _
    // Predicated region
    $region6: #{tpu_custom_call.1} parent=1 // pred_check
      _
    $region7: #{tpu_custom_call.1} parent=1 // pred_check_branch
      %21 = sbr.rel (0) target = $region9
    $region8: #{tpu_custom_call.1} parent=1 // pred_region
      %s23 = ssub.s32 64, 64
      %24 = vsyncadd [#allocation5], %s23
      %s26 = sshll.u32 [#allocation4], 4
      %s27 = int_to_ptr.vmem [resolvable:$true] %s26
      %29 = dma.hbm_to_vmem [thread:$0]  %s1, 64, %s27, [#allocation5]
    $region9: #{tpu_custom_call.1} parent=1 // pred_fallthru
      _
    // Predicated region
    $region10: #{tpu_custom_call.1} parent=1 // pred_check
      _
    $region11: #{tpu_custom_call.1} parent=1 // pred_check_branch
      %31 = sbr.rel (0) target = $region13
    $region12: #{tpu_custom_call.1} parent=1 // pred_region
      _
    $region13: #{tpu_custom_call.1} parent=1 // pred_fallthru
      _
    // Predicated region
    $region14: #{tpu_custom_call.1} parent=1 // pred_check
      _
    $region15: #{tpu_custom_call.1} parent=1 // pred_check_branch
      %33 = sbr.rel (0) target = $region17
    $region16: #{tpu_custom_call.1} parent=1 // pred_region
      %34 = dma.done [#allocation3], 128
    $region17: #{tpu_custom_call.1} parent=1 // pred_fallthru
      _
    // Predicated region
    $region18: #{tpu_custom_call.1} parent=1 // pred_check
      _
    $region19: #{tpu_custom_call.1} parent=1 // pred_check_branch
      %36 = sbr.rel (0) target = $region21
    $region20: #{tpu_custom_call.1} parent=1 // pred_region
      %37 = dma.done [#allocation5], 64
    $region21: #{tpu_custom_call.1} parent=1 // pred_fallthru
      _
    %v38 = vld [vmem:[#allocation2] sm:$0xff]
    %v39 = vld [vmem:[#allocation4] sm:$0xf]
    %v40 = vld [vmem:[%s2] sm:$0x1]
    %v42 = vlaneseq
    %v43 = vshrl.u32 %v42, 7
    %v44 = vsub.s32 0, %v43
    %v45 = vrot.slane %v40, %v44
    %vm47 = vcmask 261120
    %v49 = vsel %vm47, %v38, 0
    %v52 = vsel %vm47, %v39, 0
    %54 = vmatprep.subr.mxu0 0.0
    %55 = vmatpush1.xpose.msra.mxu0 %v52
    %56 = vmatprep.subr.mxu0 0.0
    %57 = vmatpush1.xpose.msra.mxu0 0.0
    %58 = vmatprep.subr.mxu0 0.0
    %59 = vmatpush1.xpose.msra.mxu0 0.0
    %60 = vmatprep.subr.mxu0 0.0
    %61 = vmatpush1.xpose.msra.mxu0 0.0
    %62 = vmatprep.subr.mxu0 0.0
    %63 = vmatpush1.xpose.msra.mxu0 0.0
    %64 = vmatprep.subr.mxu0 0.0
    %65 = vmatpush1.xpose.msra.mxu0 0.0
    %66 = vmatprep.subr.mxu0 0.0
    %67 = vmatpush1.xpose.msra.mxu0 0.0
    %68 = vmatprep.subr.mxu0 0.0
    %69 = vmatpush1.xpose.msra.mxu0 0.0
    %70 = vmatprep.subr.mxu0 0.0
    %71 = vmatpush1.xpose.msra.mxu0 0.0
    %72 = vmatprep.subr.mxu0 0.0
    %73 = vmatpush1.xpose.msra.mxu0 0.0
    %74 = vmatprep.subr.mxu0 0.0
    %75 = vmatpush1.xpose.msra.mxu0 0.0
    %76 = vmatprep.subr.mxu0 0.0
    %77 = vmatpush1.xpose.msra.mxu0 0.0
    %78 = vmatprep.subr.mxu0 0.0
    %79 = vmatpush1.xpose.msra.mxu0 0.0
    %80 = vmatprep.subr.mxu0 0.0
    %81 = vmatpush1.xpose.msra.mxu0 0.0
    %82 = vmatprep.subr.mxu0 0.0
    %83 = vmatpush1.xpose.msra.mxu0 0.0
    %84 = vmatprep.subr.mxu0 0.0
    %85 = vmatpush1.xpose.msra.mxu0 0.0
    %86 = vmatprep.subr.mxu0 0.0
    %87 = vmatpush1.xpose.msra.mxu0 0.0
    %88 = vmatprep.subr.mxu0 0.0
    %89 = vmatpush1.xpose.msra.mxu0 0.0
    %90 = vmatprep.subr.mxu0 0.0
    %91 = vmatpush1.xpose.msra.mxu0 0.0
    %92 = vmatprep.subr.mxu0 0.0
    %93 = vmatpush1.xpose.msra.mxu0 0.0
    %94 = vmatprep.subr.mxu0 0.0
    %95 = vmatpush1.xpose.msra.mxu0 0.0
    %96 = vmatprep.subr.mxu0 0.0
    %97 = vmatpush1.xpose.msra.mxu0 0.0
    %98 = vmatprep.subr.mxu0 0.0
    %99 = vmatpush1.xpose.msra.mxu0 0.0
    %100 = vmatprep.subr.mxu0 0.0
    %101 = vmatpush1.xpose.msra.mxu0 0.0
    %102 = vmatprep.subr.mxu0 0.0
    %103 = vmatpush1.xpose.msra.mxu0 0.0
    %104 = vmatprep.subr.mxu0 0.0
    %105 = vmatpush1.xpose.msra.mxu0 0.0
    %106 = vmatprep.subr.mxu0 0.0
    %107 = vmatpush1.xpose.msra.mxu0 0.0
    %108 = vmatprep.subr.mxu0 0.0
    %109 = vmatpush1.xpose.msra.mxu0 0.0
    %110 = vmatprep.subr.mxu0 0.0
    %111 = vmatpush1.xpose.msra.mxu0 0.0
    %112 = vmatprep.subr.mxu0 0.0
    %113 = vmatpush1.xpose.msra.mxu0 0.0
    %114 = vmatprep.subr.mxu0 0.0
    %115 = vmatpush1.xpose.msra.mxu0 0.0
    %116 = vmatprep.subr.mxu0 0.0
    %117 = vmatpush1.xpose.msra.mxu0 0.0
    %118 = vmatprep.mubr.f32.mxu0 0.0
    %119 = vmatmul.mubr.f32.gmra.mrb[0].mxu0 %v49
    %v120 = vpop.f32.mrb[0].mxu0
    %v121 = vadd.f32 %v45, %v120
    %v122 = vpop.f32.mrb[0].mxu0
    %123 = vdwg.mxu0
    %vm124 = vcmask 31744
    %125 = vst.msk [vmem:[%s3] sm:$0xff] %vm124, %v121
    // Predicated region
    $region22: #{tpu_custom_call.1} parent=1 // pred_check
      _
    $region23: #{tpu_custom_call.1} parent=1 // pred_check_branch
      %127 = sbr.rel (0) target = $region25
    $region24: #{tpu_custom_call.1} parent=1 // pred_region
      _
    $region25: #{tpu_custom_call.1} parent=1 // pred_fallthru
      _
    // Predicated region
    $region26: #{tpu_custom_call.1} parent=1 // pred_check
      _
    $region27: #{tpu_custom_call.1} parent=1 // pred_check_branch
      %129 = sbr.rel (0) target = $region29
    $region28: #{tpu_custom_call.1} parent=1 // pred_region
      _
    $region29: #{tpu_custom_call.1} parent=1 // pred_fallthru
      _
    %130 = vsyncpa [#allocation3], 1
    %131 = vsyncpa [#allocation5], 1

</llo_original>
